<compile_context>
chip_gen: v7x
topology: tpu7x:2x2x1
jax: 0.10.0
libtpu: 0.0.40
codegen_flags: <defaults>
</compile_context>

<pallas_src>
import jax
import jax.numpy as jnp
import numpy as np
from jax.experimental import pallas as pl
from jax.experimental.pallas import tpu as pltpu

# ----- module hyperparameters (mirror the PyTorch __init__ defaults) -----
INPUT_SIZE = 6
OUTPUT_SIZE = 4
FEATURE_SIZE = 16
EMBED_SIZE = 30
ENERGY_CLASSES = 3
NN_FEATURE = FEATURE_SIZE * 2          # bidirectional == True -> 32
FC1_IN = NN_FEATURE + EMBED_SIZE       # 62
FC1_OUT = FEATURE_SIZE * 4             # 64
FC2_OUT = FEATURE_SIZE * 2             # 32
FC3_OUT = OUTPUT_SIZE                  # 4

# ----- packed layout constants -----
LANES = 128
X_COLS = 16            # [q0..q5 | onehot(label,3) | 1.0 | zero-pad]  (one vreg col group)
_B1_ROW = INPUT_SIZE + ENERGY_CLASSES  # row 9 of block 0: folded fc1 bias + const lane
_W2_ROW = 16           # rows  16:144 -> fc2 weight block (128,128)
_W3_ROW = 144          # rows 144:272 -> fc3+identity weight block (128,128)
SLAB_ROWS = _W3_ROW + LANES            # 272
H1_CONST_LANE = FC1_OUT                # lane 64 of h1 carries a constant 1.0
H2_CONST_LANE = FC2_OUT                # lane 32 of h2 carries a constant 1.0
_MAX_BATCH_TILE = 4096                 # per-step VMEM ~6 MB << 32 MiB scoped default


def _round_up(n, m):
    return ((n + m - 1) // m) * m


def student_kernel(x_ref, slab_ref, out_ref):
    """3 single-pass bf16 MXU matmuls + 3 ReLUs, one dense 128-lane f32 store.

    Everything else (embedding lookup, rnn Linear, all biases) is pre-folded
    into the weight slab; dropout is identity (eval mode).
    """
    x = x_ref[...]                                   # (TB, 16) bf16
    w1 = slab_ref[0:X_COLS, :]                       # (16, 128) folded rnn/emb/b1 block
    w2 = slab_ref[_W2_ROW:_W2_ROW + LANES, :]        # (128, 128) fc2 (+b2, +const lane)
    w3 = slab_ref[_W3_ROW:_W3_ROW + LANES, :]        # (128, 128) [fc3+b3 | I_32 | 0]

    h1 = jnp.maximum(
        jnp.dot(x, w1, preferred_element_type=jnp.float32), 0.0)
    # TODO(synk): train-mode nn.Dropout(0.5) randomness not reproduced (eval mode assumed)
    h2 = jnp.maximum(
        jnp.dot(h1.astype(jnp.bfloat16), w2, preferred_element_type=jnp.float32), 0.0)
    # Lanes 0:4 -> relu(fc3(h2) + b3); lanes 4:36 -> relu(h2) == h2 (identity block).
    comb = jnp.maximum(
        jnp.dot(h2.astype(jnp.bfloat16), w3, preferred_element_type=jnp.float32), 0.0)

    out_ref[...] = comb                              # single unmasked 128-lane store


def init_params(key):
    """Deterministic parameter init (PyTorch-style uniform fan-in bounds)."""
    ks = jax.random.split(key, 9)

    def linear(kw, kb, fan_in, fan_out):
        bound = 1.0 / np.sqrt(fan_in)
        w = jax.random.uniform(kw, (fan_out, fan_in), jnp.float32, -bound, bound)
        bias = jax.random.uniform(kb, (1, fan_out), jnp.float32, -bound, bound)
        return w, bias

    emb_table = jax.random.normal(ks[0], (ENERGY_CLASSES, EMBED_SIZE), jnp.float32)
    w_rnn, b_rnn = linear(ks[1], ks[2], INPUT_SIZE, NN_FEATURE)
    w_fc1, b_fc1 = linear(ks[3], ks[4], FC1_IN, FC1_OUT)
    w_fc2, b_fc2 = linear(ks[5], ks[6], FC1_OUT, FC2_OUT)
    w_fc3, b_fc3 = linear(ks[7], ks[8], FC2_OUT, FC3_OUT)
    return dict(emb=emb_table,
                w_rnn=w_rnn, b_rnn=b_rnn,
                w_fc1=w_fc1, b_fc1=b_fc1,
                w_fc2=w_fc2, b_fc2=b_fc2,
                w_fc3=w_fc3, b_fc3=b_fc3)


def prepare_packed_params(params):
    """One-time host-side fold + pack of all weights into a single (272,128) bf16 slab.

    Folding (float64 accumulate):
      * rnn Linear and the Embedding table are pushed through fc1 (no
        nonlinearity in between), giving a (6,64) weight and a (3,64) table.
      * fc1 bias: b_rnn @ w1_r + b_fc1, applied via the constant-1.0 x column.
      * fc2/fc3 biases: applied via constant lanes (h1[:,64] == 1, h2[:,32] == 1).
      * fc3 block carries an extra identity so lanes 4:36 of the last matmul
        pass h2 straight through (h2 >= 0, so the final ReLU is a no-op there).
    """
    f64 = lambda a: np.asarray(jax.device_get(a)).astype(np.float64)
    E = f64(params["emb"])            # (3, 30)
    Wr = f64(params["w_rnn"])         # (32, 6)
    br = f64(params["b_rnn"])[0]      # (32,)
    W1 = f64(params["w_fc1"])         # (64, 62)
    b1 = f64(params["b_fc1"])[0]      # (64,)
    W2 = f64(params["w_fc2"])         # (32, 64)
    b2 = f64(params["b_fc2"])[0]      # (32,)
    W3 = f64(params["w_fc3"])         # (4, 32)
    b3 = f64(params["b_fc3"])[0]      # (4,)

    w1_t = W1.T                       # (62, 64): rows 0:30 embed part, 30:62 rnn part
    w1_e = w1_t[:EMBED_SIZE]          # (30, 64)
    w1_r = w1_t[EMBED_SIZE:]          # (32, 64)

    W_qr = Wr.T @ w1_r                # (6, 64)  rnn folded into fc1
    T = E @ w1_e                      # (3, 64)  embedding table folded into fc1
    b_fold = br @ w1_r + b1           # (64,)

    slab = np.zeros((SLAB_ROWS, LANES), np.float64)
    # --- block 0 (rows 0:16): first matmul, K = 16 = [q(6) | onehot(3) | 1 | pad(6)] ---
    slab[0:INPUT_SIZE, 0:FC1_OUT] = W_qr
    slab[INPUT_SIZE:INPUT_SIZE + ENERGY_CLASSES, 0:FC1_OUT] = T
    slab[_B1_ROW, 0:FC1_OUT] = b_fold
    slab[_B1_ROW, H1_CONST_LANE] = 1.0            # h1[:,64] = 1.0 (bias lane for fc2)
    # --- block 1 (rows 16:144): fc2 ---
    slab[_W2_ROW:_W2_ROW + FC1_OUT, 0:FC2_OUT] = W2.T
    slab[_W2_ROW + H1_CONST_LANE, 0:FC2_OUT] = b2
    slab[_W2_ROW + H1_CONST_LANE, H2_CONST_LANE] = 1.0   # h2[:,32] = 1.0 (bias lane for fc3)
    # --- block 2 (rows 144:272): fc3 + identity pass-through of h2 ---
    slab[_W3_ROW:_W3_ROW + FC2_OUT, 0:FC3_OUT] = W3.T
    slab[_W3_ROW:_W3_ROW + FC2_OUT, FC3_OUT:FC3_OUT + FC2_OUT] = np.eye(FC2_OUT)
    slab[_W3_ROW + H2_CONST_LANE, 0:FC3_OUT] = b3
    return jnp.asarray(slab, dtype=jnp.bfloat16)


def _choose_batch_tile(b):
    rows = _round_up(max(b, 1), 8)
    if rows <= 8:
        return rows                   # tiny batch: single grid step
    # >= 2 grid steps so ("parallel",) splits work across both v7x TensorCores;
    # cap the per-step tile so VMEM stays small on every generation.
    half = _round_up((rows + 1) // 2, 8)
    return min(half, _MAX_BATCH_TILE)


def student_forward_packed(x, slab):
    """Preferred entry point: returns the packed (Bp, 128) result slab + valid batch size.

    Lanes 0:4 = out (relu(fc3(...))), lanes 4:36 = last_layer_output. Returning the
    packed slab avoids a post-kernel HBM round trip; slice in the consumer if needed.
    x: (B, 1+INPUT_SIZE) with col 0 = energy class id (float).
    """
    b = x.shape[0]
    tb = _choose_batch_tile(b)
    bp = _round_up(b, tb)

    # Fold the embedding lookup & fc1 bias into the first matmul: one-hot label
    # (clamped to the valid class range) + a constant-1.0 bias column.
    lab = jnp.clip(jnp.round(x[:, 0]).astype(jnp.int32), 0, ENERGY_CLASSES - 1)
    onehot = jax.nn.one_hot(lab, ENERGY_CLASSES, dtype=jnp.float32)
    feats = jnp.concatenate(
        [x[:, 1:1 + INPUT_SIZE].astype(jnp.float32),
         onehot,
         jnp.ones((b, 1), jnp.float32)], axis=1)           # (B, 10)
    x_pad = jnp.zeros((bp, X_COLS), jnp.bfloat16).at[:b, :feats.shape[1]].set(
        feats.astype(jnp.bfloat16))

    comb = pl.pallas_call(
        student_kernel,
        out_shape=jax.ShapeDtypeStruct((bp, LANES), jnp.float32),
        grid=(bp // tb,),
        in_specs=[
            pl.BlockSpec((tb, X_COLS), lambda i: (i, 0)),
            # Grid-invariant index_map -> Mosaic does not re-DMA the slab per step.
            pl.BlockSpec((SLAB_ROWS, LANES), lambda i: (0, 0)),
        ],
        out_specs=pl.BlockSpec((tb, LANES), lambda i: (i, 0)),
        compiler_params=pltpu.CompilerParams(
            dimension_semantics=("parallel",),
            vmem_limit_bytes=32 * 1024 * 1024),
    )(x_pad, slab)
    return comb, b


def student_forward(x, slab):
    """API-compatible wrapper: returns (out (B,4), last_layer_output (B,32))."""
    comb, b = student_forward_packed(x, slab)
    # NOTE: these slices re-read comb from HBM; bandwidth-sensitive callers
    # should consume the packed result from student_forward_packed directly.
    out = comb[:b, 0:FC3_OUT]
    last = comb[:b, FC3_OUT:FC3_OUT + FC2_OUT]
    return out, last


def reference_forward(x, params):
    """Pure-JAX f32 reference mirroring the PyTorch forward (eval mode, unfolded)."""
    label = x[:, 0].astype(jnp.int32)
    q = x[:, 1:]
    embedding = params["emb"][label]
    rnn_out = q @ params["w_rnn"].T + params["b_rnn"][0]
    h = jnp.concatenate([embedding, rnn_out], axis=1)
    h1 = jax.nn.relu(h @ params["w_fc1"].T + params["b_fc1"][0])
    h2 = jax.nn.relu(h1 @ params["w_fc2"].T + params["b_fc2"][0])
    out = jax.nn.relu(h2 @ params["w_fc3"].T + params["b_fc3"][0])
    return out, h2


if __name__ == "__main__":
    key = jax.random.PRNGKey(0)
    k_params, k_label, k_q = jax.random.split(key, 3)

    params = init_params(k_params)
    slab = prepare_packed_params(params)      # one-time fold + pack (bf16)

    batch = 16                                 # exercises a 2-step grid (tb = 8)
    labels = jax.random.randint(k_label, (batch, 1), 0, ENERGY_CLASSES).astype(jnp.float32)
    q_strength = jax.random.normal(k_q, (batch, INPUT_SIZE), jnp.float32)
    x = jnp.concatenate([labels, q_strength], axis=1)     # (16, 7): col 0 = energy label

    out, last = student_forward(x, slab)
    out = jax.block_until_ready(out)
    last = jax.block_until_ready(last)

    ref_out, ref_last = reference_forward(x, params)
    # Tolerances relaxed vs the f32 kernel: matmul operands are bf16 (single-pass
    # MXU); f32 accumulation keeps the drift well inside these bounds.
    np.testing.assert_allclose(np.asarray(out), np.asarray(ref_out), rtol=5e-2, atol=5e-2)
    np.testing.assert_allclose(np.asarray(last), np.asarray(ref_last), rtol=5e-2, atol=5e-2)

    assert out.shape == (batch, OUTPUT_SIZE) and last.shape == (batch, FC2_OUT)
    print("KERNEL_OK")
</pallas_src>

<mosaic_0001>
module attributes {stable_mosaic.version = 11 : i64} {
  func.func @student_kernel(%arg0: i32, %arg1: memref<8x16xbf16, #tpu.memory_space<vmem>>, %arg2: memref<272x128xbf16, #tpu.memory_space<vmem>>, %arg3: memref<8x128xf32, #tpu.memory_space<vmem>>) attributes {dimension_semantics = [#tpu.dimension_semantics<parallel>], iteration_bounds = array<i64: 2>, scalar_prefetch = 0 : i64, scratch_operands = 0 : i64, tpu.core_type = #tpu.core_type<tc>, window_params = [{transform_indices = @transform_0, window_bounds = array<i64: 8, 16>}, {pipeline_mode = #tpu.pipeline_mode<synchronous>, transform_indices = @transform_1, window_bounds = array<i64: 272, 128>}, {transform_indices = @transform_2, window_bounds = array<i64: 8, 128>}]} {
    %c0 = arith.constant 0 : index
    %c0_0 = arith.constant 0 : index
    %0 = vector.load %arg1[%c0, %c0_0] : memref<8x16xbf16, #tpu.memory_space<vmem>>, vector<8x16xbf16>
    %c0_1 = arith.constant 0 : index
    %c0_2 = arith.constant 0 : index
    %1 = vector.load %arg2[%c0_1, %c0_2] : memref<272x128xbf16, #tpu.memory_space<vmem>>, vector<16x128xbf16>
    %c16 = arith.constant 16 : index
    %c0_3 = arith.constant 0 : index
    %2 = vector.load %arg2[%c16, %c0_3] : memref<272x128xbf16, #tpu.memory_space<vmem>>, vector<128x128xbf16>
    %c144 = arith.constant 144 : index
    %c0_4 = arith.constant 0 : index
    %3 = vector.load %arg2[%c144, %c0_4] : memref<272x128xbf16, #tpu.memory_space<vmem>>, vector<128x128xbf16>
    %cst = arith.constant dense<0.000000e+00> : vector<8x128xf32>
    %4 = tpu.matmul %0, %1, %cst {dimension_numbers = #tpu.dot_dimension_numbers<[1], [0], [0], [1], [0, 0, 1, 1], [], []>} : vector<8x16xbf16>, vector<16x128xbf16>, vector<8x128xf32> -> vector<8x128xf32>
    %cst_5 = arith.constant 0.000000e+00 : f32
    %5 = vector.broadcast %cst_5 : f32 to vector<8x128xf32>
    %6 = arith.maximumf %4, %5 : vector<8x128xf32>
    %7 = arith.truncf %6 : vector<8x128xf32> to vector<8x128xbf16>
    %cst_6 = arith.constant dense<0.000000e+00> : vector<8x128xf32>
    %8 = tpu.matmul %7, %2, %cst_6 {dimension_numbers = #tpu.dot_dimension_numbers<[1], [0], [0], [1], [0, 0, 1, 1], [], []>} : vector<8x128xbf16>, vector<128x128xbf16>, vector<8x128xf32> -> vector<8x128xf32>
    %cst_7 = arith.constant 0.000000e+00 : f32
    %9 = vector.broadcast %cst_7 : f32 to vector<8x128xf32>
    %10 = arith.maximumf %8, %9 : vector<8x128xf32>
    %11 = arith.truncf %10 : vector<8x128xf32> to vector<8x128xbf16>
    %cst_8 = arith.constant dense<0.000000e+00> : vector<8x128xf32>
    %12 = tpu.matmul %11, %3, %cst_8 {dimension_numbers = #tpu.dot_dimension_numbers<[1], [0], [0], [1], [0, 0, 1, 1], [], []>} : vector<8x128xbf16>, vector<128x128xbf16>, vector<8x128xf32> -> vector<8x128xf32>
    %cst_9 = arith.constant 0.000000e+00 : f32
    %13 = vector.broadcast %cst_9 : f32 to vector<8x128xf32>
    %14 = arith.maximumf %12, %13 : vector<8x128xf32>
    %c0_10 = arith.constant 0 : index
    %c0_11 = arith.constant 0 : index
    %15 = vector.load %arg3[%c0_10, %c0_11] : memref<8x128xf32, #tpu.memory_space<vmem>>, vector<8x128xf32>
    tpu.vector_store %arg3[%c0_10, %c0_11], %14 {strides = array<i32>} : memref<8x128xf32, #tpu.memory_space<vmem>>, vector<8x128xf32>,
    return
  }
  func.func @transform_0(%arg0: i32) -> (i32, i32) {
    %c0_i32 = arith.constant 0 : i32
    %c0_i32_0 = arith.constant 0 : i32
    return %arg0, %c0_i32 : i32, i32
  }
  func.func @transform_1(%arg0: i32) -> (i32, i32) {
    %c0_i32 = arith.constant 0 : i32
    %c0_i32_0 = arith.constant 0 : i32
    %c0_i32_1 = arith.constant 0 : i32
    return %c0_i32, %c0_i32_0 : i32, i32
  }
  func.func @transform_2(%arg0: i32) -> (i32, i32) {
    %c0_i32 = arith.constant 0 : i32
    %c0_i32_0 = arith.constant 0 : i32
    return %arg0, %c0_i32 : i32, i32
  }
}

</mosaic_0001>

<llo_original>
// kernel: tpu_custom_call.1
$region0: #{tpu_custom_call.1}
  #allocation0 [shape = 'u32[]', space=smem, size = 0x4, offset = 0x4, fixed_abs, tag = 'smem constant byte address 0x4 - core index']
  #allocation1 [shape = 'u32[144,128]{1,0:T(1,128)}', space=vmem, size = 0x12000, scoped, tag = 'internal scratch']
  %s0 = inlined_call_operand.hbm [shape: bf16[16,16], index: 0, kind: input, shape index: {}]
  %s1 = inlined_call_operand.hbm [shape: bf16[272,128], index: 1, kind: input, shape index: {}]
  %s2 = inlined_call_operand.hbm [shape: f32[16,128], index: 2, kind: output, shape index: {}]
  %s3 = sld [smem:[#allocation0]]
  $region49: #{tpu_custom_call.1} parent=0
    _
  %s5 = ssub.s32 1, %s3
  %s6 = scalar_select 0, %s5, %s3
  $region1: #{tpu_custom_call.1} parent=0
    #allocation2 [shape = 'u8[4096]{0}', space=vmem, size = 0x1000, scoped, tag = 'input window, operand 0']
    #allocation3 [shape = 's32[2]{0}', space=sflag, size = 0x8, scoped, tag = 'scoped memory for tpu_custom_call.1']
    #allocation4 [shape = 's32[2]{0}', space=sflag, size = 0x8, scoped, tag = 'scoped memory for tpu_custom_call.1']
    #allocation5 [shape = 'u8[69632]{0}', space=vmem, size = 0x11000, scoped, tag = 'input window, operand 1, single buffered']
    #allocation6 [shape = 's32[1]{0}', space=sflag, size = 0x4, scoped, tag = 'scoped memory for tpu_custom_call.1']
    #allocation7 [shape = 'u8[8192]{0}', space=vmem, size = 0x2000, scoped, tag = 'output window, operand 0']
    %7 = vsyncpa [#allocation3], 0
    %s8 = scalar_lea.sflag [#allocation3], 1
    %9 = vsyncpa %s8, 0
    %10 = vsyncpa [#allocation6], 0
    %11 = vsyncpa [#allocation4], 0
    %s12 = scalar_lea.sflag [#allocation4], 1
    %13 = vsyncpa %s12, 0
    loop: start=0, step=1, limit=4
    $region2: #{tpu_custom_call.1} parent=1 // loop_pre_header
      _
    $region3: #{tpu_custom_call.1} parent=1 // loop_header
      %s15 = sphi 0, %s19
      %p16 = scmp.ge.s32.totalorder %s15, 4
      %s25 = sphi 0, %s27
      %s28 = sphi 0, %s25
      %s29 = sphi 0, %s28
      %s45 = sphi 0, %s29
      %s49 = sphi 0, %s49
      %s51 = sphi 0, %s49
      %s52 = sphi 0, %s51
      %s66 = sphi 0, %s52
      %s72 = sphi 0, %s74
      %s75 = sphi 0, %s72
      %s76 = sphi 0, %s75
      %s92 = sphi 0, %s76
    $region4: #{tpu_custom_call.1} parent=1 // loop_header_branch
      %18 = sbr.rel (%p16) target = $region8
    $region5: #{tpu_custom_call.1} parent=1 // loop_body
      %s20 = ssub.s32 %s15, 1
      %s21 = ssub.s32 %s15, 2
      %s22 = sadd.s32 %s15, 1
      %s23 = ssub.s32 %s15, %s22
      %p24 = scmp.eq.s32.totalorder %s23, 0
      %s26 = sadd.s32 %s25, 1
      %s27 = scalar_select %p24, %s25, %s26
      %p30 = pneg %p24
      %p31 = scmp.eq.s32.totalorder %s15, 1
      %p32 = por %p30, %p31
      %p33 = scmp.ne.s32.totalorder %s25, %s28
      %p34 = scmp.eq.s32.totalorder %s15, 0
      %p35 = por %p33, %p34
      %p36 = scmp.ne.s32.totalorder %s25, %s28
      %p37 = scmp.eq.s32.totalorder %s20, 1
      %p38 = por %p36, %p37
      %p39 = scmp.ne.s32.totalorder %s28, %s29
      %p40 = scmp.eq.s32.totalorder %s20, 0
      %p41 = por %p39, %p40
      %p42 = scmp.ne.s32.totalorder %s28, %s29
      %p43 = scmp.eq.s32.totalorder %s21, 1
      %p44 = por %p42, %p43
      %p46 = scmp.ne.s32.totalorder %s29, %s45
      %p47 = scmp.eq.s32.totalorder %s21, 0
      %p48 = por %p46, %p47
      %s50 = sadd.s32 %s49, 1
      %p53 = scmp.eq.s32.totalorder %s15, 1
      %p54 = scmp.ne.s32.totalorder %s49, %s51
      %p55 = scmp.eq.s32.totalorder %s15, 0
      %p56 = por %p54, %p55
      %p57 = scmp.ne.s32.totalorder %s49, %s51
      %p58 = scmp.eq.s32.totalorder %s20, 1
      %p59 = por %p57, %p58
      %p60 = scmp.ne.s32.totalorder %s51, %s52
      %p61 = scmp.eq.s32.totalorder %s20, 0
      %p62 = por %p60, %p61
      %p63 = scmp.ne.s32.totalorder %s51, %s52
      %p64 = scmp.eq.s32.totalorder %s21, 1
      %p65 = por %p63, %p64
      %p67 = scmp.ne.s32.totalorder %s52, %s66
      %p68 = scmp.eq.s32.totalorder %s21, 0
      %p69 = por %p67, %p68
      %s70 = ssub.s32 %s15, %s22
      %p71 = scmp.eq.s32.totalorder %s70, 0
      %s73 = sadd.s32 %s72, 1
      %s74 = scalar_select %p71, %s72, %s73
      %p77 = pneg %p71
      %p78 = scmp.eq.s32.totalorder %s15, 1
      %p79 = por %p77, %p78
      %p80 = scmp.ne.s32.totalorder %s72, %s75
      %p81 = scmp.eq.s32.totalorder %s15, 0
      %p82 = por %p80, %p81
      %p83 = scmp.ne.s32.totalorder %s72, %s75
      %p84 = scmp.eq.s32.totalorder %s20, 1
      %p85 = por %p83, %p84
      %p86 = scmp.ne.s32.totalorder %s75, %s76
      %p87 = scmp.eq.s32.totalorder %s20, 0
      %p88 = por %p86, %p87
      %p89 = scmp.ne.s32.totalorder %s75, %s76
      %p90 = scmp.eq.s32.totalorder %s21, 1
      %p91 = por %p89, %p90
      %p93 = scmp.ne.s32.totalorder %s76, %s92
      %p94 = scmp.eq.s32.totalorder %s21, 0
      %p95 = por %p93, %p94
      %p96 = scmp.le.s32.totalorder 1, %s15
      %p97 = scmp.lt.s32.totalorder %s15, 3
      %p98 = pnand %p96, %p97
      %p99 = pneg %p98
      // Predicated region
      $region9: #{tpu_custom_call.1} parent=5 // pred_check
        _
      $region10: #{tpu_custom_call.1} parent=5 // pred_check_branch
        %101 = sbr.rel (%p98) target = $region12
      $region11: #{tpu_custom_call.1} parent=5 // pred_region
        %s102 = ssub.s32 %s15, 1
        // Predicated region
        $region13: #{tpu_custom_call.1} parent=11 // pred_check
          %p103 = pneg %p62
        $region14: #{tpu_custom_call.1} parent=11 // pred_check_branch
          %105 = sbr.rel (%p103) target = $region16
        $region15: #{tpu_custom_call.1} parent=11 // pred_region
          %s107 = ssub.s32 2176, 2176
          %108 = vsyncadd [#allocation6], %s107
          %s109 = sshll.u32 [#allocation5], 4
          %s110 = int_to_ptr.vmem [resolvable:$true] %s109
          %115 = dma.hbm_to_vmem [thread:$0]  %s1, 2176, %s110, [#allocation6], 64, 64, 4
        $region16: #{tpu_custom_call.1} parent=11 // pred_fallthru
          _
      $region12: #{tpu_custom_call.1} parent=5 // pred_fallthru
        _
      %p116 = scmp.lt.s32.totalorder %s15, 2
      // Predicated region
      $region17: #{tpu_custom_call.1} parent=5 // pred_check
        %p117 = pneg %p116
      $region18: #{tpu_custom_call.1} parent=5 // pred_check_branch
        %119 = sbr.rel (%p117) target = $region20
      $region19: #{tpu_custom_call.1} parent=5 // pred_region
        // Predicated region
        $region21: #{tpu_custom_call.1} parent=19 // pred_check
          %p120 = pneg %p35
        $region22: #{tpu_custom_call.1} parent=19 // pred_check_branch
          %122 = sbr.rel (%p120) target = $region24
        $region23: #{tpu_custom_call.1} parent=19 // pred_region
          %s123 = sand.u32 %s25, 1
          %s124 = scalar_lea.sflag [#allocation3], %s123
          %s125 = sand.u32 %s25, 1
          %s126 = smul.addr %s125, 4
          %s127 = scalar_lea.vmem [#allocation2], %s126
          %s129 = ssub.s32 64, 64
          %130 = vsyncadd %s124, %s129
          %s131 = smul.addr %s15, 64
          %s132 = scalar_lea.hbm %s0, %s131
          %s134 = sshll.u32 %s127, 4
          %s135 = int_to_ptr.vmem [resolvable:$true] %s134
          %137 = dma.hbm_to_vmem [thread:$0]  %s132, 64, %s135, %s124
        $region24: #{tpu_custom_call.1} parent=19 // pred_fallthru
          _
      $region20: #{tpu_custom_call.1} parent=5 // pred_fallthru
        _
      %p138 = scmp.le.s32.totalorder 1, %s15
      %p139 = scmp.lt.s32.totalorder %s15, 3
      %p140 = pnand %p138, %p139
      %p141 = pneg %p140
      // Predicated region
      $region25: #{tpu_custom_call.1} parent=5 // pred_check
        _
      $region26: #{tpu_custom_call.1} parent=5 // pred_check_branch
        %143 = sbr.rel (%p140) target = $region28
      $region27: #{tpu_custom_call.1} parent=5 // pred_region
        %s144 = ssub.s32 %s15, 1
        %s145 = sand.u32 %s28, 1
        %s146 = scalar_lea.sflag [#allocation3], %s145
        %s147 = sand.u32 %s28, 1
        %s148 = smul.addr %s147, 4
        %s149 = scalar_lea.vmem [#allocation2], %s148
        // Predicated region
        $region29: #{tpu_custom_call.1} parent=27 // pred_check
          %p150 = pneg %p41
        $region30: #{tpu_custom_call.1} parent=27 // pred_check_branch
          %152 = sbr.rel (%p150) target = $region32
        $region31: #{tpu_custom_call.1} parent=27 // pred_region
          %153 = dma.done %s146, 64
        $region32: #{tpu_custom_call.1} parent=27 // pred_fallthru
          _
        // Predicated region
        $region33: #{tpu_custom_call.1} parent=27 // pred_check
          %p154 = pneg %p62
        $region34: #{tpu_custom_call.1} parent=27 // pred_check_branch
          %156 = sbr.rel (%p154) target = $region36
        $region35: #{tpu_custom_call.1} parent=27 // pred_region
          %157 = dma.done [#allocation6], 2176
        $region36: #{tpu_custom_call.1} parent=27 // pred_fallthru
          _
        %s158 = sand.u32 %s28, 1
        %s159 = scalar_lea.sflag [#allocation3], %s158
        %s160 = sand.u32 %s28, 1
        %s161 = smul.addr %s160, 4
        %s162 = scalar_lea.vmem [#allocation2], %s161
        %p163 = pneg %p41
        %p164 = pneg %p38
        %p165 = pneg %p62
        %p166 = pneg %p59
        %p167 = pneg %p88
        %p168 = pneg %p85
        %s169 = sand.u32 %s75, 1
        %s170 = scalar_lea.sflag [#allocation4], %s169
        %s171 = sand.u32 %s75, 1
        %s172 = smul.addr %s171, 8
        %s173 = scalar_lea.vmem [#allocation7], %s172
        %v175 = vld [vmem:[%s149] sm:$0xf]
        %v176 = vld [vmem:[#allocation5] sm:$0xf]
        %v177 = vld [vmem:[#allocation5 + $0x4] sm:$0xf]
        %v178 = vld [vmem:[#allocation5 + $0x8] sm:$0xf]
        %v179 = vld [vmem:[#allocation5 + $0xc] sm:$0xf]
        %v180 = vld [vmem:[#allocation5 + $0x10] sm:$0xf]
        %v181 = vld [vmem:[#allocation5 + $0x14] sm:$0xf]
        %v182 = vld [vmem:[#allocation5 + $0x18] sm:$0xf]
        %v183 = vld [vmem:[#allocation5 + $0x1c] sm:$0xf]
        %v184 = vld [vmem:[#allocation5 + $0x20] sm:$0xf]
        %v185 = vld [vmem:[#allocation5 + $0x24] sm:$0xf]
        %v186 = vld [vmem:[#allocation5 + $0x28] sm:$0xf]
        %v187 = vld [vmem:[#allocation5 + $0x2c] sm:$0xf]
        %v188 = vld [vmem:[#allocation5 + $0x30] sm:$0xf]
        %v189 = vld [vmem:[#allocation5 + $0x34] sm:$0xf]
        %v190 = vld [vmem:[#allocation5 + $0x38] sm:$0xf]
        %v191 = vld [vmem:[#allocation5 + $0x3c] sm:$0xf]
        %v192 = vld [vmem:[#allocation5 + $0x40] sm:$0xf]
        %v193 = vld [vmem:[#allocation5 + $0x44] sm:$0xf]
        %v194 = vld [vmem:[#allocation5 + $0x48] sm:$0xf]
        %v195 = vld [vmem:[#allocation5 + $0x4c] sm:$0xf]
        %v196 = vld [vmem:[#allocation5 + $0x50] sm:$0xf]
        %v197 = vld [vmem:[#allocation5 + $0x54] sm:$0xf]
        %v198 = vld [vmem:[#allocation5 + $0x58] sm:$0xf]
        %v199 = vld [vmem:[#allocation5 + $0x5c] sm:$0xf]
        %v200 = vld [vmem:[#allocation5 + $0x60] sm:$0xf]
        %v201 = vld [vmem:[#allocation5 + $0x64] sm:$0xf]
        %v202 = vld [vmem:[#allocation5 + $0x68] sm:$0xf]
        %v203 = vld [vmem:[#allocation5 + $0x6c] sm:$0xf]
        %v204 = vld [vmem:[#allocation5 + $0x70] sm:$0xf]
        %v205 = vld [vmem:[#allocation5 + $0x74] sm:$0xf]
        %v206 = vld [vmem:[#allocation5 + $0x78] sm:$0xf]
        %v207 = vld [vmem:[#allocation5 + $0x7c] sm:$0xf]
        %v208 = vld [vmem:[#allocation5 + $0x80] sm:$0xf]
        %v209 = vld [vmem:[#allocation5 + $0x84] sm:$0xf]
        %v212 = vunpack.c.l.b16 %v176
        %v213 = vunpack.c.l.b16 %v177
        %v214 = vpack.c.b16 %v213, %v212
        %vm216 = vcmask 130048
        %v218 = vsel %vm216, %v175, 0
        %220 = vmatprep.subr.bf16.mxu0 0
        %221 = vmatpush1.bf16.msra.mxu0 %v214
        %222 = vmatprep.subr.bf16.mxu0 0
        %223 = vmatpush1.bf16.msra.mxu0 0
        %224 = vmatprep.subr.bf16.mxu0 0
        %225 = vmatpush1.bf16.msra.mxu0 0
        %226 = vmatprep.subr.bf16.mxu0 0
        %227 = vmatpush1.bf16.msra.mxu0 0
        %228 = vmatprep.subr.bf16.mxu0 0
        %229 = vmatpush1.bf16.msra.mxu0 0
        %230 = vmatprep.subr.bf16.mxu0 0
        %231 = vmatpush1.bf16.msra.mxu0 0
        %232 = vmatprep.subr.bf16.mxu0 0
        %233 = vmatpush1.bf16.msra.mxu0 0
        %234 = vmatprep.subr.bf16.mxu0 0
        %235 = vmatpush1.bf16.msra.mxu0 0
        %236 = vmatprep.subr.bf16.mxu0 0
        %237 = vmatpush1.bf16.msra.mxu0 0
        %238 = vmatprep.subr.bf16.mxu0 0
        %239 = vmatpush1.bf16.msra.mxu0 0
        %240 = vmatprep.subr.bf16.mxu0 0
        %241 = vmatpush1.bf16.msra.mxu0 0
        %242 = vmatprep.subr.bf16.mxu0 0
        %243 = vmatpush1.bf16.msra.mxu0 0
        %244 = vmatprep.subr.bf16.mxu0 0
        %245 = vmatpush1.bf16.msra.mxu0 0
        %246 = vmatprep.subr.bf16.mxu0 0
        %247 = vmatpush1.bf16.msra.mxu0 0
        %248 = vmatprep.subr.bf16.mxu0 0
        %249 = vmatpush1.bf16.msra.mxu0 0
        %250 = vmatprep.subr.bf16.mxu0 0
        %251 = vmatpush1.bf16.msra.mxu0 0
        %252 = vmatprep.mubr.bf16.mxu0 0
        %253 = vmatmul.mubr.bf16.gmra.mrb[0].mxu0 %v218
        %v254 = vpop.f32.mrb[0].mxu0
        %v255 = vadd.f32 0.0, %v254
        %v256 = vpop.f32.mrb[0].mxu0
        %v257 = vpop.f32.mrb[0].mxu0
        %v258 = vpop.f32.mrb[0].mxu0
        %259 = vdwg.mxu0
        %v260 = vmax.f32 %v255, 0.0
        %v261 = vpack.c.bf16 %v260, %v260
        %v278 = vunpack.c.l.b16 %v178
        %v279 = vunpack.c.l.b16 %v179
        %v280 = vunpack.c.l.b16 %v180
        %v281 = vunpack.c.l.b16 %v181
        %v282 = vunpack.c.l.b16 %v182
        %v283 = vunpack.c.l.b16 %v183
        %v284 = vunpack.c.l.b16 %v184
        %v285 = vunpack.c.l.b16 %v185
        %v286 = vunpack.c.l.b16 %v186
        %v287 = vunpack.c.l.b16 %v187
        %v288 = vunpack.c.l.b16 %v188
        %v289 = vunpack.c.l.b16 %v189
        %v290 = vunpack.c.l.b16 %v190
        %v291 = vunpack.c.l.b16 %v191
        %v292 = vunpack.c.l.b16 %v192
        %v293 = vunpack.c.l.b16 %v193
        %v294 = vpack.c.b16 %v279, %v278
        %v295 = vpack.c.b16 %v281, %v280
        %v296 = vpack.c.b16 %v283, %v282
        %v297 = vpack.c.b16 %v285, %v284
        %v298 = vpack.c.b16 %v287, %v286
        %v299 = vpack.c.b16 %v289, %v288
        %v300 = vpack.c.b16 %v291, %v290
        %v301 = vpack.c.b16 %v293, %v292
        %310 = vmatprep.subr.bf16.mxu0 0
        %311 = vmatpush1.bf16.msra.mxu0 %v294
        %312 = vmatprep.subr.bf16.mxu0 0
        %313 = vmatpush1.bf16.msra.mxu0 %v295
        %314 = vmatprep.subr.bf16.mxu0 0
        %315 = vmatpush1.bf16.msra.mxu0 %v296
        %316 = vmatprep.subr.bf16.mxu0 0
        %317 = vmatpush1.bf16.msra.mxu0 %v297
        %318 = vmatprep.subr.bf16.mxu0 0
        %319 = vmatpush1.bf16.msra.mxu0 %v298
        %320 = vmatprep.subr.bf16.mxu0 0
        %321 = vmatpush1.bf16.msra.mxu0 %v299
        %322 = vmatprep.subr.bf16.mxu0 0
        %323 = vmatpush1.bf16.msra.mxu0 %v300
        %324 = vmatprep.subr.bf16.mxu0 0
        %325 = vmatpush1.bf16.msra.mxu0 %v301
        %326 = vmatprep.subr.bf16.mxu0 0
        %327 = vmatpush1.bf16.msra.mxu0 0
        %328 = vmatprep.subr.bf16.mxu0 0
        %329 = vmatpush1.bf16.msra.mxu0 0
        %330 = vmatprep.subr.bf16.mxu0 0
        %331 = vmatpush1.bf16.msra.mxu0 0
        %332 = vmatprep.subr.bf16.mxu0 0
        %333 = vmatpush1.bf16.msra.mxu0 0
        %334 = vmatprep.subr.bf16.mxu0 0
        %335 = vmatpush1.bf16.msra.mxu0 0
        %336 = vmatprep.subr.bf16.mxu0 0
        %337 = vmatpush1.bf16.msra.mxu0 0
        %338 = vmatprep.subr.bf16.mxu0 0
        %339 = vmatpush1.bf16.msra.mxu0 0
        %340 = vmatprep.subr.bf16.mxu0 0
        %341 = vmatpush1.bf16.msra.mxu0 0
        %342 = vmatprep.mubr.bf16.mxu0 0
        %343 = vmatmul.mubr.bf16.gmra.mrb[0].mxu0 %v261
        %v344 = vpop.f32.mrb[0].mxu0
        %v345 = vadd.f32 0.0, %v344
        %v346 = vpop.f32.mrb[0].mxu0
        %v347 = vpop.f32.mrb[0].mxu0
        %v348 = vpop.f32.mrb[0].mxu0
        %349 = vdwg.mxu0
        %v350 = vmax.f32 %v345, 0.0
        %v351 = vpack.c.bf16 %v350, %v350
        %v368 = vunpack.c.l.b16 %v194
        %v369 = vunpack.c.l.b16 %v195
        %v370 = vunpack.c.l.b16 %v196
        %v371 = vunpack.c.l.b16 %v197
        %v372 = vunpack.c.l.b16 %v198
        %v373 = vunpack.c.l.b16 %v199
        %v374 = vunpack.c.l.b16 %v200
        %v375 = vunpack.c.l.b16 %v201
        %v376 = vunpack.c.l.b16 %v202
        %v377 = vunpack.c.l.b16 %v203
        %v378 = vunpack.c.l.b16 %v204
        %v379 = vunpack.c.l.b16 %v205
        %v380 = vunpack.c.l.b16 %v206
        %v381 = vunpack.c.l.b16 %v207
        %v382 = vunpack.c.l.b16 %v208
        %v383 = vunpack.c.l.b16 %v209
        %v384 = vpack.c.b16 %v369, %v368
        %v385 = vpack.c.b16 %v371, %v370
        %v386 = vpack.c.b16 %v373, %v372
        %v387 = vpack.c.b16 %v375, %v374
        %v388 = vpack.c.b16 %v377, %v376
        %v389 = vpack.c.b16 %v379, %v378
        %v390 = vpack.c.b16 %v381, %v380
        %v391 = vpack.c.b16 %v383, %v382
        %400 = vmatprep.subr.bf16.mxu0 0
        %401 = vmatpush1.bf16.msra.mxu0 %v384
        %402 = vmatprep.subr.bf16.mxu0 0
        %403 = vmatpush1.bf16.msra.mxu0 %v385
        %404 = vmatprep.subr.bf16.mxu0 0
        %405 = vmatpush1.bf16.msra.mxu0 %v386
        %406 = vmatprep.subr.bf16.mxu0 0
        %407 = vmatpush1.bf16.msra.mxu0 %v387
        %408 = vmatprep.subr.bf16.mxu0 0
        %409 = vmatpush1.bf16.msra.mxu0 %v388
        %410 = vmatprep.subr.bf16.mxu0 0
        %411 = vmatpush1.bf16.msra.mxu0 %v389
        %412 = vmatprep.subr.bf16.mxu0 0
        %413 = vmatpush1.bf16.msra.mxu0 %v390
        %414 = vmatprep.subr.bf16.mxu0 0
        %415 = vmatpush1.bf16.msra.mxu0 %v391
        %416 = vmatprep.subr.bf16.mxu0 0
        %417 = vmatpush1.bf16.msra.mxu0 0
        %418 = vmatprep.subr.bf16.mxu0 0
        %419 = vmatpush1.bf16.msra.mxu0 0
        %420 = vmatprep.subr.bf16.mxu0 0
        %421 = vmatpush1.bf16.msra.mxu0 0
        %422 = vmatprep.subr.bf16.mxu0 0
        %423 = vmatpush1.bf16.msra.mxu0 0
        %424 = vmatprep.subr.bf16.mxu0 0
        %425 = vmatpush1.bf16.msra.mxu0 0
        %426 = vmatprep.subr.bf16.mxu0 0
        %427 = vmatpush1.bf16.msra.mxu0 0
        %428 = vmatprep.subr.bf16.mxu0 0
        %429 = vmatpush1.bf16.msra.mxu0 0
        %430 = vmatprep.subr.bf16.mxu0 0
        %431 = vmatpush1.bf16.msra.mxu0 0
        %432 = vmatprep.mubr.bf16.mxu0 0
        %433 = vmatmul.mubr.bf16.gmra.mrb[0].mxu0 %v351
        %v434 = vpop.f32.mrb[0].mxu0
        %v435 = vadd.f32 0.0, %v434
        %v436 = vpop.f32.mrb[0].mxu0
        %v437 = vpop.f32.mrb[0].mxu0
        %v438 = vpop.f32.mrb[0].mxu0
        %439 = vdwg.mxu0
        %v440 = vmax.f32 %v435, 0.0
        %441 = vst [vmem:[%s173] sm:$0xff] %v440
        %s442 = sand.u32 %s75, 1
        %s443 = scalar_lea.sflag [#allocation4], %s442
        %s444 = sand.u32 %s75, 1
        %s445 = smul.addr %s444, 8
        %s446 = scalar_lea.vmem [#allocation7], %s445
        // Predicated region
        $region37: #{tpu_custom_call.1} parent=27 // pred_check
          %p447 = pneg %p85
        $region38: #{tpu_custom_call.1} parent=27 // pred_check_branch
          %449 = sbr.rel (%p447) target = $region40
        $region39: #{tpu_custom_call.1} parent=27 // pred_region
          %s451 = ssub.s32 128, 128
          %452 = vsyncadd %s443, %s451
          %s453 = smul.addr %s20, 128
          %s454 = scalar_lea.hbm %s2, %s453
          %s456 = sshll.u32 %s446, 4
          %s457 = int_to_ptr.vmem [resolvable:$true] %s456
          %459 = dma.vmem_to_hbm [thread:$0]  %s457, 128, %s454, %s443
        $region40: #{tpu_custom_call.1} parent=27 // pred_fallthru
          _
      $region28: #{tpu_custom_call.1} parent=5 // pred_fallthru
        _
      %p460 = scmp.le.s32.totalorder 2, %s15
      // Predicated region
      $region41: #{tpu_custom_call.1} parent=5 // pred_check
        %p461 = pneg %p460
      $region42: #{tpu_custom_call.1} parent=5 // pred_check_branch
        %463 = sbr.rel (%p461) target = $region44
      $region43: #{tpu_custom_call.1} parent=5 // pred_region
        %s464 = ssub.s32 %s15, 2
        // Predicated region
        $region45: #{tpu_custom_call.1} parent=43 // pred_check
          %p465 = pneg %p91
        $region46: #{tpu_custom_call.1} parent=43 // pred_check_branch
          %467 = sbr.rel (%p465) target = $region48
        $region47: #{tpu_custom_call.1} parent=43 // pred_region
          %s468 = sand.u32 %s76, 1
          %s469 = scalar_lea.sflag [#allocation4], %s468
          %s470 = sand.u32 %s76, 1
          %s471 = smul.addr %s470, 8
          %s472 = scalar_lea.vmem [#allocation7], %s471
          %473 = dma.done %s469, 128
        $region48: #{tpu_custom_call.1} parent=43 // pred_fallthru
          _
      $region44: #{tpu_custom_call.1} parent=5 // pred_fallthru
        _
    $region6: #{tpu_custom_call.1} parent=1 // loop_footer
      %s19 = sadd.s32 1, %s15
    $region7: #{tpu_custom_call.1} parent=1 // loop_footer_branch
      %14 = sbr.rel target = $region3
    $region8: #{tpu_custom_call.1} parent=1 // loop_exit
      _
    %474 = vsyncpa [#allocation3], 1
    %s475 = scalar_lea.sflag [#allocation3], 1
    %476 = vsyncpa %s475, 1
    %477 = vsyncpa [#allocation6], 1
    %478 = vsyncpa [#allocation4], 1
    %s479 = scalar_lea.sflag [#allocation4], 1
    %480 = vsyncpa %s479, 1

</llo_original>
